<compile_context>
chip_gen: v6e
topology: v6e:2x2x1
jax: 0.10.0
libtpu: 0.0.40
codegen_flags: <defaults>
</compile_context>

<pallas_src>
import functools

import numpy as np
import jax
import jax.numpy as jnp
from jax.experimental import pallas as pl
from jax.experimental.pallas import tpu as pltpu

_LANE = 128


def _cb_loss_kernel(labels_ref, logits_ref, w_ref, out_ref, *, batch):
    logits = logits_ref[...].astype(jnp.float32)        # (C, TB) classes x batch-lanes
    labels = labels_ref[...]                            # (1, TB) int32
    w_cls = w_ref[...]                                  # (C, 1)  float32

    C, TB = logits.shape

    # In-kernel validity mask against the true batch size (robust to whatever
    # values live in the padded tail).
    col = pl.program_id(0) * TB + jax.lax.broadcasted_iota(jnp.int32, (1, TB), 1)
    valid = col < batch                                              # (1, TB) bool

    # Target-class mask (bool one-hot), gated by validity.
    cls_idx = jax.lax.broadcasted_iota(jnp.int32, (C, TB), 0)
    is_tgt = (cls_idx == labels) & valid                             # (C, TB) bool

    # log-softmax over the class (sublane) axis.
    m = jnp.max(logits, axis=0, keepdims=True)                       # (1, TB)
    z = logits - m                                                   # (C, TB)
    e = jnp.exp(z)                                                   # (C, TB)
    s = jnp.sum(e, axis=0, keepdims=True)                            # (1, TB)
    log_s = jnp.log(s)                                               # (1, TB)

    # PyTorch binary_cross_entropy clamps each log term at -100.
    #   log(1 - p_c) = log(s - e_c) - log(s)   (no probs, no reciprocal)
    log_1mp = jnp.maximum(jnp.log(s - e) - log_s, -100.0)            # (C, TB)

    # Per-sample pieces:
    #   sum_c bce_c = -( sum_c log(1-p_c) + log(p_y) - log(1-p_y) )
    sum_l1mp = jnp.sum(log_1mp, axis=0, keepdims=True)                         # (1, TB)
    z_tgt = jnp.sum(jnp.where(is_tgt, z, 0.0), axis=0, keepdims=True)          # (1, TB)
    l1_tgt = jnp.sum(jnp.where(is_tgt, log_1mp, 0.0), axis=0, keepdims=True)   # (1, TB)
    w_smp = jnp.sum(jnp.where(is_tgt, w_cls, 0.0), axis=0, keepdims=True)      # (1, TB)
    log_p_tgt = jnp.maximum(z_tgt - log_s, -100.0)                             # (1, TB)

    per_sample = -w_smp * (jnp.where(valid, sum_l1mp, 0.0) + log_p_tgt - l1_tgt)

    # Reduce the TB lanes of this tile into one lane-dense (1, 128) partial row
    # (vreg-aligned 128-lane chunk adds; XLU/VALU cost is negligible).
    acc = per_sample[:, 0:_LANE]
    for j in range(1, TB // _LANE):
        acc = acc + per_sample[:, j * _LANE:(j + 1) * _LANE]
    out_ref[...] = acc


def _choose_tile(batch, tile_b_max):
    """Pick a lane-dense batch tile; keep >= 2 grid steps when possible (v7x)."""
    tile_cap = max(_LANE, (tile_b_max // _LANE) * _LANE)
    b128 = ((batch + _LANE - 1) // _LANE) * _LANE
    if b128 <= _LANE:
        tile_b = _LANE
    else:
        half = ((b128 // 2 + _LANE - 1) // _LANE) * _LANE
        tile_b = min(tile_cap, half)
    b_pad = ((batch + tile_b - 1) // tile_b) * tile_b
    return tile_b, b_pad


def cb_loss_pallas(logits, labels, class_weights, *, tile_b_max=32768):
    """logits: (B, C) float (f32 or bf16), labels: (B,) int, class_weights: (C,) f32."""
    batch, num_classes = logits.shape
    tile_b, b_pad = _choose_tile(batch, tile_b_max)
    num_tiles = b_pad // tile_b

    # Lane-dense layout: classes on sublanes, batch on lanes.  The transpose
    # (+ tail pad, if any) fuses into one extra XLA copy pass; feeding logits
    # already as (C, B) would remove it.
    logits_t = jnp.transpose(logits)                                  # (C, B), native dtype
    labels_row = labels.astype(jnp.int32).reshape(1, batch)
    if b_pad != batch:
        logits_t = jnp.pad(logits_t, ((0, 0), (0, b_pad - batch)))
        labels_row = jnp.pad(labels_row, ((0, 0), (0, b_pad - batch)),
                             constant_values=-1)
    w_col = class_weights.astype(jnp.float32).reshape(num_classes, 1)

    itemsize = jnp.dtype(logits.dtype).itemsize
    cost = pl.CostEstimate(
        flops=15 * batch * num_classes,
        transcendentals=2 * batch * num_classes + batch,
        bytes_accessed=(b_pad * num_classes * itemsize + b_pad * 4
                        + num_tiles * _LANE * 4 + num_classes * 4))

    kernel = functools.partial(_cb_loss_kernel, batch=batch)
    partial_sums = pl.pallas_call(
        kernel,
        out_shape=jax.ShapeDtypeStruct((1, num_tiles * _LANE), jnp.float32),
        grid=(num_tiles,),
        in_specs=[
            pl.BlockSpec((1, tile_b), lambda i: (0, i)),               # labels   (1, B)
            pl.BlockSpec((num_classes, tile_b), lambda i: (0, i)),     # logits^T (C, B)
            pl.BlockSpec((num_classes, 1), lambda i: (0, 0)),          # class weights
        ],
        out_specs=pl.BlockSpec((1, _LANE), lambda i: (0, i)),
        compiler_params=pltpu.CompilerParams(
            dimension_semantics=("parallel",)),
        cost_estimate=cost,
    )(labels_row, logits_t, w_col)

    # Finish the mean over the real B*C elements (tiny num_tiles*128 sum).
    return jnp.sum(partial_sums) / (batch * num_classes)


def make_cb_class_weights(samples_per_cls, num_classes, beta):
    """Static host-side glue (matches the numpy preamble of calculate_cb_loss)."""
    effective_num = 1.0 - np.power(beta, samples_per_cls)
    weights = (1.0 - beta) / np.array(effective_num)
    weights = weights / np.sum(weights) * num_classes
    return jnp.asarray(weights, dtype=jnp.float32)


def cb_loss_reference(logits, labels, class_weights):
    """Pure-JAX reference mirroring calculate_cb_loss (softmax + weighted BCE)."""
    B, C = logits.shape
    onehot = jax.nn.one_hot(labels, C, dtype=jnp.float32)
    sample_w = jnp.sum(class_weights[None, :] * onehot, axis=1, keepdims=True)
    p = jax.nn.softmax(logits.astype(jnp.float32), axis=1)
    log_p = jnp.maximum(jnp.log(p), -100.0)
    log_1mp = jnp.maximum(jnp.log(1.0 - p), -100.0)
    bce = -(onehot * log_p + (1.0 - onehot) * log_1mp)
    return jnp.mean(sample_w * bce)


if __name__ == "__main__":
    # CBLoss(samples_per_cls, num_classes, loss_type='softmax', beta=0.9999)
    num_classes = 8
    beta = 0.9999
    samples_per_cls = [100, 50, 200, 25, 75, 10, 300, 5]   # deterministic init
    class_weights = make_cb_class_weights(samples_per_cls, num_classes, beta)

    key = jax.random.PRNGKey(0)
    k1, k2, k3, k4, k5, k6 = jax.random.split(key, 6)

    # --- small case: single 128-lane tile, heavy tail masking ---
    b1 = 16
    logits1 = jax.random.normal(k1, (b1, num_classes), dtype=jnp.float32)
    labels1 = jax.random.randint(k2, (b1,), 0, num_classes, dtype=jnp.int32)
    out1 = jax.block_until_ready(cb_loss_pallas(logits1, labels1, class_weights))
    ref1 = jax.block_until_ready(cb_loss_reference(logits1, labels1, class_weights))
    assert np.allclose(np.asarray(out1), np.asarray(ref1), rtol=1e-5, atol=1e-6), (
        float(out1), float(ref1))

    # --- multi-tile case: batch not a multiple of 128 (grid + tail masking) ---
    b2 = 1000
    logits2 = jax.random.normal(k3, (b2, num_classes), dtype=jnp.float32)
    labels2 = jax.random.randint(k4, (b2,), 0, num_classes, dtype=jnp.int32)
    out2 = jax.block_until_ready(cb_loss_pallas(logits2, labels2, class_weights))
    ref2 = jax.block_until_ready(cb_loss_reference(logits2, labels2, class_weights))
    assert np.allclose(np.asarray(out2), np.asarray(ref2), rtol=1e-4, atol=1e-6), (
        float(out2), float(ref2))

    # --- bf16 logits stay bf16 through the pallas_call (upcast in-register) ---
    b3 = 4096
    logits3 = jax.random.normal(k5, (b3, num_classes),
                                dtype=jnp.float32).astype(jnp.bfloat16)
    labels3 = jax.random.randint(k6, (b3,), 0, num_classes, dtype=jnp.int32)
    out3 = jax.block_until_ready(cb_loss_pallas(logits3, labels3, class_weights))
    ref3 = jax.block_until_ready(cb_loss_reference(logits3, labels3, class_weights))
    assert np.allclose(np.asarray(out3), np.asarray(ref3), rtol=1e-4, atol=1e-6), (
        float(out3), float(ref3))

    print("KERNEL_OK")
</pallas_src>

<mosaic_0001>
module attributes {stable_mosaic.version = 11 : i64} {
  func.func @_cb_loss_kernel(%arg0: i32, %arg1: memref<1x128xi32, #tpu.memory_space<vmem>>, %arg2: memref<8x128xf32, #tpu.memory_space<vmem>>, %arg3: memref<8x1xf32, #tpu.memory_space<vmem>>, %arg4: memref<1x128xf32, #tpu.memory_space<vmem>>) attributes {dimension_semantics = [#tpu.dimension_semantics<parallel>], iteration_bounds = array<i64: 1>, scalar_prefetch = 0 : i64, scratch_operands = 0 : i64, tpu.core_type = #tpu.core_type<tc>, window_params = [{transform_indices = @transform_0, window_bounds = array<i64: 1, 128>}, {transform_indices = @transform_1, window_bounds = array<i64: 8, 128>}, {pipeline_mode = #tpu.pipeline_mode<synchronous>, transform_indices = @transform_2, window_bounds = array<i64: 8, 1>}, {transform_indices = @transform_3, window_bounds = array<i64: 1, 128>}]} {
    %c0 = arith.constant 0 : index
    %c0_0 = arith.constant 0 : index
    %0 = vector.load %arg2[%c0, %c0_0] : memref<8x128xf32, #tpu.memory_space<vmem>>, vector<8x128xf32>
    %c0_1 = arith.constant 0 : index
    %c0_2 = arith.constant 0 : index
    %1 = vector.load %arg1[%c0_1, %c0_2] : memref<1x128xi32, #tpu.memory_space<vmem>>, vector<1x128xi32>
    %c0_3 = arith.constant 0 : index
    %c0_4 = arith.constant 0 : index
    %2 = vector.load %arg3[%c0_3, %c0_4] : memref<8x1xf32, #tpu.memory_space<vmem>>, vector<8x1xf32>
    %c128_i32 = arith.constant 128 : i32
    %3 = arith.muli %arg0, %c128_i32 : i32
    %4 = tpu.iota {dimensions = array<i32: 1>} : vector<1x128xi32>
    %5 = vector.broadcast %3 : i32 to vector<1x128xi32>
    %6 = arith.addi %5, %4 : vector<1x128xi32>
    %c16_i32 = arith.constant 16 : i32
    %7 = vector.broadcast %c16_i32 : i32 to vector<1x128xi32>
    %8 = arith.cmpi slt, %6, %7 : vector<1x128xi32>
    %9 = tpu.iota {dimensions = array<i32: 0>} : vector<8x128xi32>
    %10 = vector.broadcast %1 : vector<1x128xi32> to vector<8x128xi32>
    %11 = arith.cmpi eq, %9, %10 : vector<8x128xi32>
    %12 = vector.broadcast %8 : vector<1x128xi1> to vector<8x128xi1>
    %13 = arith.andi %11, %12 : vector<8x128xi1>
    %cst = arith.constant dense<0xFF800000> : vector<128xf32>
    %14 = vector.multi_reduction <maximumf>, %0, %cst [0] : vector<8x128xf32> to vector<128xf32>
    %15 = vector.shape_cast %14 : vector<128xf32> to vector<1x128xf32>
    %16 = vector.broadcast %15 : vector<1x128xf32> to vector<8x128xf32>
    %17 = arith.subf %0, %16 : vector<8x128xf32>
    %18 = math.exp %17 : vector<8x128xf32>
    %cst_5 = arith.constant dense<0.000000e+00> : vector<128xf32>
    %19 = vector.multi_reduction <add>, %18, %cst_5 [0] : vector<8x128xf32> to vector<128xf32>
    %20 = vector.shape_cast %19 : vector<128xf32> to vector<1x128xf32>
    %21 = math.log %20 : vector<1x128xf32>
    %22 = vector.broadcast %20 : vector<1x128xf32> to vector<8x128xf32>
    %23 = arith.subf %22, %18 : vector<8x128xf32>
    %24 = math.log %23 : vector<8x128xf32>
    %25 = vector.broadcast %21 : vector<1x128xf32> to vector<8x128xf32>
    %26 = arith.subf %24, %25 : vector<8x128xf32>
    %cst_6 = arith.constant -1.000000e+02 : f32
    %27 = vector.broadcast %cst_6 : f32 to vector<8x128xf32>
    %28 = arith.maximumf %26, %27 : vector<8x128xf32>
    %cst_7 = arith.constant dense<0.000000e+00> : vector<128xf32>
    %29 = vector.multi_reduction <add>, %28, %cst_7 [0] : vector<8x128xf32> to vector<128xf32>
    %30 = vector.shape_cast %29 : vector<128xf32> to vector<1x128xf32>
    %cst_8 = arith.constant 0.000000e+00 : f32
    %31 = vector.broadcast %cst_8 : f32 to vector<8x128xf32>
    %32 = arith.select %13, %17, %31 : vector<8x128xi1>, vector<8x128xf32>
    %cst_9 = arith.constant dense<0.000000e+00> : vector<128xf32>
    %33 = vector.multi_reduction <add>, %32, %cst_9 [0] : vector<8x128xf32> to vector<128xf32>
    %34 = vector.shape_cast %33 : vector<128xf32> to vector<1x128xf32>
    %cst_10 = arith.constant 0.000000e+00 : f32
    %35 = vector.broadcast %cst_10 : f32 to vector<8x128xf32>
    %36 = arith.select %13, %28, %35 : vector<8x128xi1>, vector<8x128xf32>
    %cst_11 = arith.constant dense<0.000000e+00> : vector<128xf32>
    %37 = vector.multi_reduction <add>, %36, %cst_11 [0] : vector<8x128xf32> to vector<128xf32>
    %38 = vector.shape_cast %37 : vector<128xf32> to vector<1x128xf32>
    %cst_12 = arith.constant 0.000000e+00 : f32
    %39 = vector.shape_cast %2 : vector<8x1xf32> to vector<8x1xf32>
    %40 = vector.broadcast %39 : vector<8x1xf32> to vector<8x128xf32>
    %41 = vector.broadcast %cst_12 : f32 to vector<8x128xf32>
    %42 = arith.select %13, %40, %41 : vector<8x128xi1>, vector<8x128xf32>
    %cst_13 = arith.constant dense<0.000000e+00> : vector<128xf32>
    %43 = vector.multi_reduction <add>, %42, %cst_13 [0] : vector<8x128xf32> to vector<128xf32>
    %44 = vector.shape_cast %43 : vector<128xf32> to vector<1x128xf32>
    %45 = arith.subf %34, %21 : vector<1x128xf32>
    %cst_14 = arith.constant -1.000000e+02 : f32
    %46 = vector.broadcast %cst_14 : f32 to vector<1x128xf32>
    %47 = arith.maximumf %45, %46 : vector<1x128xf32>
    %cst_15 = arith.constant 0.000000e+00 : f32
    %48 = vector.broadcast %cst_15 : f32 to vector<1x128xf32>
    %49 = arith.subf %48, %44 : vector<1x128xf32>
    %cst_16 = arith.constant 0.000000e+00 : f32
    %50 = vector.broadcast %cst_16 : f32 to vector<1x128xf32>
    %51 = arith.select %8, %30, %50 : vector<1x128xi1>, vector<1x128xf32>
    %52 = arith.addf %51, %47 : vector<1x128xf32>
    %53 = arith.subf %52, %38 : vector<1x128xf32>
    %54 = arith.mulf %49, %53 : vector<1x128xf32>
    %c0_17 = arith.constant 0 : index
    %c0_18 = arith.constant 0 : index
    %55 = vector.load %arg4[%c0_17, %c0_18] : memref<1x128xf32, #tpu.memory_space<vmem>>, vector<1x128xf32>
    tpu.vector_store %arg4[%c0_17, %c0_18], %54 {strides = array<i32>} : memref<1x128xf32, #tpu.memory_space<vmem>>, vector<1x128xf32>,
    return
  }
  func.func @transform_0(%arg0: i32) -> (i32, i32) {
    %c0_i32 = arith.constant 0 : i32
    %c0_i32_0 = arith.constant 0 : i32
    return %c0_i32, %arg0 : i32, i32
  }
  func.func @transform_1(%arg0: i32) -> (i32, i32) {
    %c0_i32 = arith.constant 0 : i32
    %c0_i32_0 = arith.constant 0 : i32
    return %c0_i32, %arg0 : i32, i32
  }
  func.func @transform_2(%arg0: i32) -> (i32, i32) {
    %c0_i32 = arith.constant 0 : i32
    %c0_i32_0 = arith.constant 0 : i32
    %c0_i32_1 = arith.constant 0 : i32
    return %c0_i32, %c0_i32_0 : i32, i32
  }
  func.func @transform_3(%arg0: i32) -> (i32, i32) {
    %c0_i32 = arith.constant 0 : i32
    %c0_i32_0 = arith.constant 0 : i32
    return %c0_i32, %arg0 : i32, i32
  }
}

</mosaic_0001>

<llo_original>
// kernel: tpu_custom_call.1
$region0: #{tpu_custom_call.1}
  #allocation0 [shape = 'u32[]', space=smem, size = 0x4, offset = 0x4, fixed_abs, tag = 'smem constant byte address 0x4 - core index']
  #allocation1 [shape = 'u32[144,128]{1,0:T(1,128)}', space=vmem, size = 0x12000, scoped, tag = 'internal scratch']
  %s0 = inlined_call_operand.vmem [shape: s32[1,128], index: 0, kind: input, shape index: {}]
  %s1 = inlined_call_operand.vmem [shape: f32[8,128], index: 1, kind: input, shape index: {}]
  %s2 = inlined_call_operand.vmem [shape: f32[8,1], index: 2, kind: input, shape index: {}]
  %s3 = inlined_call_operand.hbm [shape: f32[1,128], index: 3, kind: output, shape index: {}]
  %s4 = sld [smem:[#allocation0]]
  $region22: #{tpu_custom_call.1} parent=0
    _
  %s6 = ssub.s32 1, %s4
  %s7 = scalar_select 0, %s6, %s4
  $region1: #{tpu_custom_call.1} parent=0
    #allocation2 [shape = 'u8[512]{0}', space=vmem, size = 0x400, scoped, tag = 'output window, operand 0, single buffered']
    #allocation3 [shape = 's32[1]{0}', space=sflag, size = 0x4, scoped, tag = 'scoped memory for tpu_custom_call.1']
    %8 = vsyncpa [#allocation3], 0
    // Predicated region
    $region2: #{tpu_custom_call.1} parent=1 // pred_check
      _
    $region3: #{tpu_custom_call.1} parent=1 // pred_check_branch
      %10 = sbr.rel (0) target = $region5
    $region4: #{tpu_custom_call.1} parent=1 // pred_region
      _
    $region5: #{tpu_custom_call.1} parent=1 // pred_fallthru
      _
    // Predicated region
    $region6: #{tpu_custom_call.1} parent=1 // pred_check
      _
    $region7: #{tpu_custom_call.1} parent=1 // pred_check_branch
      %12 = sbr.rel (0) target = $region9
    $region8: #{tpu_custom_call.1} parent=1 // pred_region
      _
    $region9: #{tpu_custom_call.1} parent=1 // pred_fallthru
      _
    // Predicated region
    $region10: #{tpu_custom_call.1} parent=1 // pred_check
      _
    $region11: #{tpu_custom_call.1} parent=1 // pred_check_branch
      %14 = sbr.rel (0) target = $region13
    $region12: #{tpu_custom_call.1} parent=1 // pred_region
      _
    $region13: #{tpu_custom_call.1} parent=1 // pred_fallthru
      _
    %v15 = vld [vmem:[%s1] sm:$0xff]
    %v16 = vld [vmem:[%s0] sm:$0x1]
    %v17 = vld [vmem:[%s2] sm:$0xff]
    %s18 = smul.u32 0, 128
    %v19 = vlaneseq
    %v20 = vand.u32 %v19, 127
    %v21 = vstv %s18
    %v22 = vadd.s32 %v21, %v20
    %vm23 = vcmp.lt.s32.totalorder %v22, 16
    %v24 = vlaneseq
    %v25 = vshrl.u32 %v24, 7
    %v26 = vlaneseq
    %v27 = vshrl.u32 %v26, 7
    %v28 = vsub.s32 0, %v27
    %v29 = vrot.slane %v16, %v28
    %vm30 = vcmp.eq.s32.totalorder %v25, %v29
    %v31 = vsel %vm23, 1, 0
    %vm32 = vcmp.eq.s32.totalorder %v31, 1
    %vm33 = vmand %vm30, %vm32
    %v34 = vrot.slane %v15, 4
    %v35 = vmax.f32 %v15, %v34
    %v36 = vrot.slane %v35, 2
    %v37 = vmax.f32 %v35, %v36
    %v38 = vrot.slane %v37, 1
    %v39 = vmax.f32 %v37, %v38
    %v40 = vsub.f32 %v15, %v39
    %v41 = vmul.f32 %v40, 1.442695
    %v42 = vpow.pop %v41
    %v43 = vrot.slane %v42, 4
    %v44 = vadd.f32 %v42, %v43
    %v45 = vrot.slane %v44, 2
    %v46 = vadd.f32 %v44, %v45
    %v47 = vrot.slane %v46, 1
    %v48 = vadd.f32 %v46, %v47
    %v49 = vlog2.pop %v48
    %v50 = vmul.f32 %v49, 0.6931472
    %v51 = vsub.f32 %v48, %v42
    %v52 = vlog2.pop %v51
    %v53 = vmul.f32 %v52, 0.6931472
    %v54 = vsub.f32 %v53, %v50
    %v55 = vmax.f32 %v54, -100.0
    %v56 = vrot.slane %v55, 4
    %v57 = vadd.f32 %v55, %v56
    %v58 = vrot.slane %v57, 2
    %v59 = vadd.f32 %v57, %v58
    %v60 = vrot.slane %v59, 1
    %v61 = vadd.f32 %v59, %v60
    %v62 = vsel %vm33, %v40, 0.0
    %v63 = vrot.slane %v62, 4
    %v64 = vadd.f32 %v62, %v63
    %v65 = vrot.slane %v64, 2
    %v66 = vadd.f32 %v64, %v65
    %v67 = vrot.slane %v66, 1
    %v68 = vadd.f32 %v66, %v67
    %v69 = vsel %vm33, %v55, 0.0
    %v70 = vrot.slane %v69, 4
    %v71 = vadd.f32 %v69, %v70
    %v72 = vrot.slane %v71, 2
    %v73 = vadd.f32 %v71, %v72
    %v74 = vrot.slane %v73, 1
    %v75 = vadd.f32 %v73, %v74
    %77 = vset.pattern.permute.xlu0 0
    %78 = vperm.xlu0 %77, %v17
    %v79 = vpop.permute.xlu0 %78
    %v81 = vsel %vm33, %v79, 0.0
    %v82 = vrot.slane %v81, 4
    %v83 = vadd.f32 %v81, %v82
    %v84 = vrot.slane %v83, 2
    %v85 = vadd.f32 %v83, %v84
    %v86 = vrot.slane %v85, 1
    %v87 = vadd.f32 %v85, %v86
    %v88 = vsub.f32 %v68, %v50
    %v89 = vmax.f32 %v88, -100.0
    %v90 = vsub.f32 0.0, %v87
    %v91 = vsel %vm23, %v61, 0.0
    %v92 = vadd.f32 %v91, %v89
    %v93 = vsub.f32 %v92, %v75
    %v94 = vmul.f32 %v90, %v93
    %95 = vst [vmem:[#allocation2] sm:$0x1] %v94
    // Predicated region
    $region14: #{tpu_custom_call.1} parent=1 // pred_check
      _
    $region15: #{tpu_custom_call.1} parent=1 // pred_check_branch
      %97 = sbr.rel (0) target = $region17
    $region16: #{tpu_custom_call.1} parent=1 // pred_region
      %s99 = ssub.s32 16, 16
      %100 = vsyncadd [#allocation3], %s99
      %s102 = sshll.u32 [#allocation2], 4
      %s103 = int_to_ptr.vmem [resolvable:$true] %s102
      %105 = dma.vmem_to_hbm [thread:$0]  %s103, 16, %s3, [#allocation3]
    $region17: #{tpu_custom_call.1} parent=1 // pred_fallthru
      _
    // Predicated region
    $region18: #{tpu_custom_call.1} parent=1 // pred_check
      _
    $region19: #{tpu_custom_call.1} parent=1 // pred_check_branch
      %107 = sbr.rel (0) target = $region21
    $region20: #{tpu_custom_call.1} parent=1 // pred_region
      %108 = dma.done [#allocation3], 16
    $region21: #{tpu_custom_call.1} parent=1 // pred_fallthru
      _
    %109 = vsyncpa [#allocation3], 1

</llo_original>
